<compile_context>
chip_gen: v7x
topology: tpu7x:2x2x1
jax: 0.10.0
libtpu: 0.0.40
codegen_flags: <defaults>
</compile_context>

<pallas_src>
import functools

import jax
import jax.numpy as jnp
from jax.experimental import pallas as pl
from jax.experimental.pallas import tpu as pltpu


VGG_MEAN = (0.485, 0.456, 0.406)
VGG_STD_BASE = (0.229, 0.224, 0.225)


# ----------------------------------------------------------------------------
# small helpers
# ----------------------------------------------------------------------------
def _round_up(x, m):
    return ((x + m - 1) // m) * m


def _vmem_limit_bytes(est_bytes):
    """2x the estimated working set, never below the 32 MiB scoped default,
    capped at 3/4 of physical VMEM (headroom for compiler-internal scratch —
    matters most on v7x's 64 MiB/TC)."""
    try:
        cap = int(pltpu.get_tpu_info().vmem_capacity_bytes)
    except Exception:
        cap = 64 * 2 ** 20
    cap = (cap * 3) // 4
    return int(min(cap, max(32 * 2 ** 20, 2 * int(est_bytes))))


def _im2col_3x3(x):
    """(N, C, H, W) -> (N, H*W, C*9) patches for a 3x3 / pad=1 / stride=1 conv.
    Column ordering matches w.reshape(OC, C*9): col = c*9 + kh*3 + kw."""
    N, C, H, W = x.shape
    xp = jnp.pad(x, ((0, 0), (0, 0), (1, 1), (1, 1)))
    cols = [xp[:, :, i:i + H, j:j + W] for i in range(3) for j in range(3)]
    cols = jnp.stack(cols, axis=2)                  # (N, C, 9, H, W)
    cols = cols.reshape(N, C * 9, H * W)            # (N, K, M)
    return jnp.transpose(cols, (0, 2, 1))           # (N, M, K)


def mean_shift(x, rgb_range=1.0):
    """MeanShift 1x1 conv == per-channel affine: (x - rgb_range*mean) / std."""
    mean = jnp.asarray(VGG_MEAN, x.dtype).reshape(1, 3, 1, 1)
    std = (jnp.asarray(VGG_STD_BASE, x.dtype) * rgb_range).reshape(1, 3, 1, 1)
    return (x - rgb_range * mean) / std


def max_pool2(x):
    """2x2 / stride-2 max pool (VGG), NCHW, even H/W."""
    N, C, H, W = x.shape
    return x.reshape(N, C, H // 2, 2, W // 2, 2).max(axis=(3, 5))


# ----------------------------------------------------------------------------
# Pallas kernel: (TM, K) patches x (K, OC) weights -> (TM, OC), fused bias+ReLU
# ----------------------------------------------------------------------------
def _conv_mm_kernel(p_ref, w_ref, b_ref, o_ref, *, apply_relu):
    # p_ref: (TM, K) im2col patch tile (compute dtype)
    # w_ref: (K, OC)  resident weight panel (compute dtype)
    # b_ref: (1, OC)  f32 bias
    acc = jnp.dot(p_ref[...], w_ref[...], preferred_element_type=jnp.float32)
    acc = acc + b_ref[...]
    if apply_relu:
        acc = jnp.maximum(acc, 0.0)
    o_ref[...] = acc.astype(o_ref.dtype)


def conv3x3_relu(x, w, b, *, apply_relu=True, compute_dtype=jnp.bfloat16,
                 out_dtype=None, tm=256):
    """3x3 conv, pad=1, stride=1, NCHW in/out, fused bias + ReLU.
    w: (OC, C, 3, 3), b: (OC,)."""
    N, C, H, W = x.shape
    OC = w.shape[0]
    K = C * 9
    M = H * W
    out_dtype = out_dtype or x.dtype
    item = jnp.dtype(compute_dtype).itemsize

    patches = _im2col_3x3(x)                        # (N, M, K)

    # Pad the pixel axis to a tile multiple (never a giant full-extent tile).
    tm_eff = min(tm, _round_up(M, 8))
    M_pad = _round_up(M, tm_eff)
    if M_pad != M:
        patches = jnp.pad(patches, ((0, 0), (0, M_pad - M), (0, 0)))

    p = patches.astype(compute_dtype)
    w_mat = jnp.transpose(w.reshape(OC, K), (1, 0)).astype(compute_dtype)
    b_row = b.reshape(1, OC).astype(jnp.float32)

    # working set: 2x patch tile (double-buffered) + weight panel (resident,
    # budgeted double) + f32 accumulator + 2x output tile + bias.
    est = (2 * tm_eff * K * item
           + 2 * K * OC * item
           + tm_eff * OC * 4
           + 2 * tm_eff * OC * jnp.dtype(out_dtype).itemsize
           + OC * 4)

    grid = (N, M_pad // tm_eff)
    out = pl.pallas_call(
        functools.partial(_conv_mm_kernel, apply_relu=apply_relu),
        out_shape=jax.ShapeDtypeStruct((N, M_pad, OC), out_dtype),
        grid_spec=pltpu.PrefetchScalarGridSpec(
            num_scalar_prefetch=0,
            grid=grid,
            in_specs=[
                pl.BlockSpec((None, tm_eff, K), lambda n, i: (n, i, 0)),
                pl.BlockSpec((K, OC), lambda n, i: (0, 0)),   # resident weights
                pl.BlockSpec((1, OC), lambda n, i: (0, 0)),   # resident bias
            ],
            out_specs=pl.BlockSpec((None, tm_eff, OC), lambda n, i: (n, i, 0)),
        ),
        compiler_params=pltpu.CompilerParams(
            dimension_semantics=("parallel", "parallel"),
            vmem_limit_bytes=_vmem_limit_bytes(est)),
    )(p, w_mat, b_row)

    out = out[:, :M, :]                              # drop pixel padding
    return jnp.transpose(out.reshape(N, H, W, OC), (0, 3, 1, 2))


# ----------------------------------------------------------------------------
# LTE: MeanShift -> slice1 -> slice2 -> slice3 (VGG19 features [0:2],[2:7],[7:12])
# ----------------------------------------------------------------------------
def init_lte_params(key):
    # TODO(synk): the PyTorch module loads pretrained VGG19 weights; there is
    # no file/network access here, so we use deterministic He-scaled random
    # weights with the exact same shapes/structure.
    shapes = [(64, 3), (64, 64), (128, 64), (128, 128), (256, 128)]
    params = []
    for oc, ic in shapes:
        key, kw, kb = jax.random.split(key, 3)
        w = jax.random.normal(kw, (oc, ic, 3, 3), jnp.float32) * ((2.0 / (ic * 9)) ** 0.5)
        b = jax.random.normal(kb, (oc,), jnp.float32) * 0.1
        params.append((w, b))
    return params


def lte_forward(x, params, rgb_range=1.0, compute_dtype=jnp.bfloat16):
    """Returns (x_lv1, x_lv2, x_lv3) exactly like LTE.forward."""
    (w1, b1), (w2, b2), (w3, b3), (w4, b4), (w5, b5) = params
    x = mean_shift(x, rgb_range)
    # slice1: Conv(3->64)+ReLU
    x = conv3x3_relu(x, w1, b1, compute_dtype=compute_dtype)
    x_lv1 = x
    # slice2: Conv(64->64)+ReLU, MaxPool2, Conv(64->128)+ReLU
    x = conv3x3_relu(x, w2, b2, compute_dtype=compute_dtype)
    x = max_pool2(x)
    x = conv3x3_relu(x, w3, b3, compute_dtype=compute_dtype)
    x_lv2 = x
    # slice3: Conv(128->128)+ReLU, MaxPool2, Conv(128->256)+ReLU
    x = conv3x3_relu(x, w4, b4, compute_dtype=compute_dtype)
    x = max_pool2(x)
    x = conv3x3_relu(x, w5, b5, compute_dtype=compute_dtype)
    x_lv3 = x
    return x_lv1, x_lv2, x_lv3


# ----------------------------------------------------------------------------
# Pure-XLA reference for the correctness check
# ----------------------------------------------------------------------------
def _conv_ref(x, w, b):
    y = jax.lax.conv_general_dilated(
        x, w, window_strides=(1, 1), padding=((1, 1), (1, 1)),
        dimension_numbers=('NCHW', 'OIHW', 'NCHW'),
        precision=jax.lax.Precision.HIGHEST)
    return jnp.maximum(y + b[None, :, None, None], 0.0)


def lte_reference(x, params, rgb_range=1.0):
    (w1, b1), (w2, b2), (w3, b3), (w4, b4), (w5, b5) = params
    x = mean_shift(x, rgb_range)
    x = _conv_ref(x, w1, b1); x_lv1 = x
    x = _conv_ref(x, w2, b2); x = max_pool2(x); x = _conv_ref(x, w3, b3); x_lv2 = x
    x = _conv_ref(x, w4, b4); x = max_pool2(x); x = _conv_ref(x, w5, b5); x_lv3 = x
    return x_lv1, x_lv2, x_lv3


def _max_rel_err(a, b):
    return float(jnp.max(jnp.abs(a - b)) / (jnp.max(jnp.abs(b)) + 1e-6))


if __name__ == "__main__":
    key = jax.random.PRNGKey(0)
    kx, kp = jax.random.split(key)

    N, C, H, W = 2, 3, 16, 16
    x = jax.random.uniform(kx, (N, C, H, W), jnp.float32)   # RGB-like in [0, 1)
    params = init_lte_params(kp)

    ref = lte_reference(x, params)

    # f32-operand path: tight check against the XLA (HIGHEST precision) reference.
    out_f32 = lte_forward(x, params, compute_dtype=jnp.float32)
    jax.block_until_ready(out_f32)
    assert out_f32[0].shape == (N, 64, H, W)
    assert out_f32[1].shape == (N, 128, H // 2, W // 2)
    assert out_f32[2].shape == (N, 256, H // 4, W // 4)
    for o, r in zip(out_f32, ref):
        assert bool(jnp.all(jnp.isfinite(o)))
        assert _max_rel_err(o, r) < 3e-2

    # bf16-operand path (recommended default on v5e/v6e/v7x; f32 accumulation).
    out_bf16 = lte_forward(x, params, compute_dtype=jnp.bfloat16)
    jax.block_until_ready(out_bf16)
    for o, r in zip(out_bf16, ref):
        assert o.dtype == r.dtype == jnp.float32
        assert bool(jnp.all(jnp.isfinite(o)))
        assert _max_rel_err(o, r) < 6e-2

    print("KERNEL_OK")
</pallas_src>

<mosaic_0001>
module attributes {stable_mosaic.version = 11 : i64} {
  func.func @_conv_mm_kernel(%arg0: i32, %arg1: i32, %arg2: memref<1x256x27xf32, #tpu.memory_space<vmem>>, %arg3: memref<27x64xf32, #tpu.memory_space<vmem>>, %arg4: memref<1x64xf32, #tpu.memory_space<vmem>>, %arg5: memref<1x256x64xf32, #tpu.memory_space<vmem>>) attributes {dimension_semantics = [#tpu.dimension_semantics<parallel>, #tpu.dimension_semantics<parallel>], iteration_bounds = array<i64: 2, 1>, scalar_prefetch = 0 : i64, scratch_operands = 0 : i64, tpu.core_type = #tpu.core_type<tc>, window_params = [{transform_indices = @transform_0, window_bounds = array<i64: 1, 256, 27>}, {pipeline_mode = #tpu.pipeline_mode<synchronous>, transform_indices = @transform_1, window_bounds = array<i64: 27, 64>}, {pipeline_mode = #tpu.pipeline_mode<synchronous>, transform_indices = @transform_2, window_bounds = array<i64: 1, 64>}, {transform_indices = @transform_3, window_bounds = array<i64: 1, 256, 64>}]} {
    %c0 = arith.constant 0 : index
    %c0_0 = arith.constant 0 : index
    %c0_1 = arith.constant 0 : index
    %0 = vector.load %arg2[%c0, %c0_0, %c0_1] : memref<1x256x27xf32, #tpu.memory_space<vmem>>, vector<1x256x27xf32>
    %1 = vector.shape_cast %0 : vector<1x256x27xf32> to vector<256x27xf32>
    %c0_2 = arith.constant 0 : index
    %c0_3 = arith.constant 0 : index
    %2 = vector.load %arg3[%c0_2, %c0_3] : memref<27x64xf32, #tpu.memory_space<vmem>>, vector<27x64xf32>
    %cst = arith.constant dense<0.000000e+00> : vector<256x64xf32>
    %3 = tpu.matmul %1, %2, %cst {dimension_numbers = #tpu.dot_dimension_numbers<[1], [0], [0], [1], [0, 0, 1, 1], [], []>} : vector<256x27xf32>, vector<27x64xf32>, vector<256x64xf32> -> vector<256x64xf32>
    %c0_4 = arith.constant 0 : index
    %c0_5 = arith.constant 0 : index
    %4 = vector.load %arg4[%c0_4, %c0_5] : memref<1x64xf32, #tpu.memory_space<vmem>>, vector<1x64xf32>
    %5 = vector.broadcast %4 : vector<1x64xf32> to vector<256x64xf32>
    %6 = arith.addf %3, %5 : vector<256x64xf32>
    %cst_6 = arith.constant 0.000000e+00 : f32
    %7 = vector.broadcast %cst_6 : f32 to vector<256x64xf32>
    %8 = arith.maximumf %6, %7 : vector<256x64xf32>
    %c0_7 = arith.constant 0 : index
    %c0_8 = arith.constant 0 : index
    %c0_9 = arith.constant 0 : index
    %9 = vector.load %arg5[%c0_7, %c0_8, %c0_9] : memref<1x256x64xf32, #tpu.memory_space<vmem>>, vector<1x256x64xf32>
    %10 = vector.shape_cast %9 : vector<1x256x64xf32> to vector<256x64xf32>
    %11 = vector.shape_cast %8 : vector<256x64xf32> to vector<1x256x64xf32>
    tpu.vector_store %arg5[%c0_7, %c0_8, %c0_9], %11 {strides = array<i32>} : memref<1x256x64xf32, #tpu.memory_space<vmem>>, vector<1x256x64xf32>,
    return
  }
  func.func @transform_0(%arg0: i32, %arg1: i32) -> (i32, i32, i32) {
    %c0_i32 = arith.constant 0 : i32
    %c0_i32_0 = arith.constant 0 : i32
    return %arg0, %arg1, %c0_i32 : i32, i32, i32
  }
  func.func @transform_1(%arg0: i32, %arg1: i32) -> (i32, i32) {
    %c0_i32 = arith.constant 0 : i32
    %c0_i32_0 = arith.constant 0 : i32
    %c0_i32_1 = arith.constant 0 : i32
    return %c0_i32, %c0_i32_0 : i32, i32
  }
  func.func @transform_2(%arg0: i32, %arg1: i32) -> (i32, i32) {
    %c0_i32 = arith.constant 0 : i32
    %c0_i32_0 = arith.constant 0 : i32
    %c0_i32_1 = arith.constant 0 : i32
    return %c0_i32, %c0_i32_0 : i32, i32
  }
  func.func @transform_3(%arg0: i32, %arg1: i32) -> (i32, i32, i32) {
    %c0_i32 = arith.constant 0 : i32
    %c0_i32_0 = arith.constant 0 : i32
    return %arg0, %arg1, %c0_i32 : i32, i32, i32
  }
}

</mosaic_0001>

<llo_original>
// kernel: tpu_custom_call.1
$region0: #{tpu_custom_call.1}
  #allocation0 [shape = 'u32[]', space=smem, size = 0x4, offset = 0x4, fixed_abs, tag = 'smem constant byte address 0x4 - core index']
  #allocation1 [shape = 'u32[144,128]{1,0:T(1,128)}', space=vmem, size = 0x12000, scoped, tag = 'internal scratch']
  %s0 = inlined_call_operand.vmem [shape: f32[2,256,27], index: 0, kind: input, shape index: {}]
  %s1 = inlined_call_operand.vmem [shape: f32[27,64], index: 1, kind: input, shape index: {}]
  %s2 = inlined_call_operand.vmem [shape: f32[1,64], index: 2, kind: input, shape index: {}]
  %s3 = inlined_call_operand.vmem [shape: f32[2,256,64], index: 3, kind: output, shape index: {}]
  %s4 = sld [smem:[#allocation0]]
  $region45: #{tpu_custom_call.1} parent=0
    _
  %s6 = ssub.s32 1, %s4
  %s7 = scalar_select 0, %s6, %s4
  loop: start=0, step=1, limit=4
  $region2: #{tpu_custom_call.1} parent=0 // loop_pre_header
    _
  $region3: #{tpu_custom_call.1} parent=0 // loop_header
    %s9 = sphi 0, %s13
    %p10 = scmp.ge.s32.totalorder %s9, 4
    %s16 = sphi 0, %s28
    %s17 = sphi 0, %s24
    %s18 = sphi 0, %s16
    %s19 = sphi 0, %s17
    %s20 = sphi 0, %s18
    %s21 = sphi 0, %s19
    %s33 = sphi 0, %s35
    %s36 = sphi 0, %s33
    %s37 = sphi 0, %s36
    %s53 = sphi 0, %s37
    %s57 = sphi 0, %s57
    %s59 = sphi 0, %s57
    %s60 = sphi 0, %s59
    %s74 = sphi 0, %s60
    %s78 = sphi 0, %s78
    %s80 = sphi 0, %s78
    %s81 = sphi 0, %s80
    %s95 = sphi 0, %s81
    %s103 = sphi 0, %s105
    %s106 = sphi 0, %s103
    %s107 = sphi 0, %s106
    %s123 = sphi 0, %s107
  $region4: #{tpu_custom_call.1} parent=0 // loop_header_branch
    %12 = sbr.rel (%p10) target = $region8
  $region5: #{tpu_custom_call.1} parent=0 // loop_body
    %s14 = ssub.s32 %s9, 1
    %s15 = ssub.s32 %s9, 2
    %s22 = sadd.s32 1, %s17
    %p23 = scmp.ge.s32.totalorder %s22, 1
    %s24 = scalar_select %p23, 0, %s22
    %s25 = sadd.s32 1, %s16
    %s26 = scalar_select %p23, %s25, %s16
    %p27 = scmp.ge.s32.totalorder %s26, 2
    %s28 = scalar_select %p27, 0, %s26
    %s29 = ssub.s32 %s16, %s28
    %s30 = ssub.s32 %s17, %s24
    %s31 = sor.u32 %s29, %s30
    %p32 = scmp.eq.s32.totalorder %s31, 0
    %s34 = sadd.s32 %s33, 1
    %s35 = scalar_select %p32, %s33, %s34
    %p38 = pneg %p32
    %p39 = scmp.eq.s32.totalorder %s9, 1
    %p40 = por %p38, %p39
    %p41 = scmp.ne.s32.totalorder %s33, %s36
    %p42 = scmp.eq.s32.totalorder %s9, 0
    %p43 = por %p41, %p42
    %p44 = scmp.ne.s32.totalorder %s33, %s36
    %p45 = scmp.eq.s32.totalorder %s14, 1
    %p46 = por %p44, %p45
    %p47 = scmp.ne.s32.totalorder %s36, %s37
    %p48 = scmp.eq.s32.totalorder %s14, 0
    %p49 = por %p47, %p48
    %p50 = scmp.ne.s32.totalorder %s36, %s37
    %p51 = scmp.eq.s32.totalorder %s15, 1
    %p52 = por %p50, %p51
    %p54 = scmp.ne.s32.totalorder %s37, %s53
    %p55 = scmp.eq.s32.totalorder %s15, 0
    %p56 = por %p54, %p55
    %s58 = sadd.s32 %s57, 1
    %p61 = scmp.eq.s32.totalorder %s9, 1
    %p62 = scmp.ne.s32.totalorder %s57, %s59
    %p63 = scmp.eq.s32.totalorder %s9, 0
    %p64 = por %p62, %p63
    %p65 = scmp.ne.s32.totalorder %s57, %s59
    %p66 = scmp.eq.s32.totalorder %s14, 1
    %p67 = por %p65, %p66
    %p68 = scmp.ne.s32.totalorder %s59, %s60
    %p69 = scmp.eq.s32.totalorder %s14, 0
    %p70 = por %p68, %p69
    %p71 = scmp.ne.s32.totalorder %s59, %s60
    %p72 = scmp.eq.s32.totalorder %s15, 1
    %p73 = por %p71, %p72
    %p75 = scmp.ne.s32.totalorder %s60, %s74
    %p76 = scmp.eq.s32.totalorder %s15, 0
    %p77 = por %p75, %p76
    %s79 = sadd.s32 %s78, 1
    %p82 = scmp.eq.s32.totalorder %s9, 1
    %p83 = scmp.ne.s32.totalorder %s78, %s80
    %p84 = scmp.eq.s32.totalorder %s9, 0
    %p85 = por %p83, %p84
    %p86 = scmp.ne.s32.totalorder %s78, %s80
    %p87 = scmp.eq.s32.totalorder %s14, 1
    %p88 = por %p86, %p87
    %p89 = scmp.ne.s32.totalorder %s80, %s81
    %p90 = scmp.eq.s32.totalorder %s14, 0
    %p91 = por %p89, %p90
    %p92 = scmp.ne.s32.totalorder %s80, %s81
    %p93 = scmp.eq.s32.totalorder %s15, 1
    %p94 = por %p92, %p93
    %p96 = scmp.ne.s32.totalorder %s81, %s95
    %p97 = scmp.eq.s32.totalorder %s15, 0
    %p98 = por %p96, %p97
    %s99 = ssub.s32 %s16, %s28
    %s100 = ssub.s32 %s17, %s24
    %s101 = sor.u32 %s99, %s100
    %p102 = scmp.eq.s32.totalorder %s101, 0
    %s104 = sadd.s32 %s103, 1
    %s105 = scalar_select %p102, %s103, %s104
    %p108 = pneg %p102
    %p109 = scmp.eq.s32.totalorder %s9, 1
    %p110 = por %p108, %p109
    %p111 = scmp.ne.s32.totalorder %s103, %s106
    %p112 = scmp.eq.s32.totalorder %s9, 0
    %p113 = por %p111, %p112
    %p114 = scmp.ne.s32.totalorder %s103, %s106
    %p115 = scmp.eq.s32.totalorder %s14, 1
    %p116 = por %p114, %p115
    %p117 = scmp.ne.s32.totalorder %s106, %s107
    %p118 = scmp.eq.s32.totalorder %s14, 0
    %p119 = por %p117, %p118
    %p120 = scmp.ne.s32.totalorder %s106, %s107
    %p121 = scmp.eq.s32.totalorder %s15, 1
    %p122 = por %p120, %p121
    %p124 = scmp.ne.s32.totalorder %s107, %s123
    %p125 = scmp.eq.s32.totalorder %s15, 0
    %p126 = por %p124, %p125
    %p127 = scmp.le.s32.totalorder 1, %s9
    %p128 = scmp.lt.s32.totalorder %s9, 3
    %p129 = pnand %p127, %p128
    %p130 = pneg %p129
    // Predicated region
    $region9: #{tpu_custom_call.1} parent=5 // pred_check
      _
    $region10: #{tpu_custom_call.1} parent=5 // pred_check_branch
      %132 = sbr.rel (%p129) target = $region12
    $region11: #{tpu_custom_call.1} parent=5 // pred_region
      %s133 = ssub.s32 %s9, 1
      // Predicated region
      $region13: #{tpu_custom_call.1} parent=11 // pred_check
        %p134 = pneg %p70
      $region14: #{tpu_custom_call.1} parent=11 // pred_check_branch
        %136 = sbr.rel (%p134) target = $region16
      $region15: #{tpu_custom_call.1} parent=11 // pred_region
        _
      $region16: #{tpu_custom_call.1} parent=11 // pred_fallthru
        _
      // Predicated region
      $region17: #{tpu_custom_call.1} parent=11 // pred_check
        %p137 = pneg %p91
      $region18: #{tpu_custom_call.1} parent=11 // pred_check_branch
        %139 = sbr.rel (%p137) target = $region20
      $region19: #{tpu_custom_call.1} parent=11 // pred_region
        _
      $region20: #{tpu_custom_call.1} parent=11 // pred_fallthru
        _
    $region12: #{tpu_custom_call.1} parent=5 // pred_fallthru
      _
    %p140 = scmp.lt.s32.totalorder %s9, 2
    // Predicated region
    $region21: #{tpu_custom_call.1} parent=5 // pred_check
      %p141 = pneg %p140
    $region22: #{tpu_custom_call.1} parent=5 // pred_check_branch
      %143 = sbr.rel (%p141) target = $region24
    $region23: #{tpu_custom_call.1} parent=5 // pred_region
      // Predicated region
      $region25: #{tpu_custom_call.1} parent=23 // pred_check
        %p144 = pneg %p43
      $region26: #{tpu_custom_call.1} parent=23 // pred_check_branch
        %146 = sbr.rel (%p144) target = $region28
      $region27: #{tpu_custom_call.1} parent=23 // pred_region
        %s147 = smul.u32 32, %s17
        %p148 = scmp.lt.s32.totalorder %s16, 1
        %s149 = scalar_select %p148, %s16, 1
        %p150 = scmp.lt.s32.totalorder %s147, 31
        %s151 = scalar_select %p150, %s147, 31
        %s152 = smul.addr %s149, 32
        %s153 = sadd.s32 %s151, %s152
        %s154 = smul.addr %s153, 8
        %s155 = scalar_lea.vmem %s0, %s154
        %s156 = smul.u32 32, %s17
      $region28: #{tpu_custom_call.1} parent=23 // pred_fallthru
        _
    $region24: #{tpu_custom_call.1} parent=5 // pred_fallthru
      _
    %p157 = scmp.le.s32.totalorder 1, %s9
    %p158 = scmp.lt.s32.totalorder %s9, 3
    %p159 = pnand %p157, %p158
    %p160 = pneg %p159
    // Predicated region
    $region29: #{tpu_custom_call.1} parent=5 // pred_check
      _
    $region30: #{tpu_custom_call.1} parent=5 // pred_check_branch
      %162 = sbr.rel (%p159) target = $region32
    $region31: #{tpu_custom_call.1} parent=5 // pred_region
      %s163 = ssub.s32 %s9, 1
      %s164 = smul.u32 32, %s19
      %p165 = scmp.lt.s32.totalorder %s18, 1
      %s166 = scalar_select %p165, %s18, 1
      %p167 = scmp.lt.s32.totalorder %s164, 31
      %s168 = scalar_select %p167, %s164, 31
      %s169 = smul.addr %s166, 32
      %s170 = sadd.s32 %s168, %s169
      %s171 = smul.addr %s170, 8
      %s172 = scalar_lea.vmem %s0, %s171
      %p173 = pneg %p49
      %p174 = pneg %p46
      %p175 = pneg %p70
      %p176 = pneg %p67
      %p177 = pneg %p91
      %p178 = pneg %p88
      %p179 = pneg %p119
      %p180 = pneg %p116
      %s181 = smul.u32 32, %s19
      %p182 = scmp.lt.s32.totalorder %s18, 1
      %s183 = scalar_select %p182, %s18, 1
      %p184 = scmp.lt.s32.totalorder %s181, 31
      %s185 = scalar_select %p184, %s181, 31
      %s186 = smul.addr %s183, 32
      %s187 = sadd.s32 %s185, %s186
      %s188 = smul.addr %s187, 8
      %s189 = scalar_lea.vmem %s3, %s188
      %s190 = smul.u32 32, %s19
      %p191 = scmp.lt.s32.totalorder %s18, 1
      %s192 = scalar_select %p191, %s18, 1
      %p193 = scmp.lt.s32.totalorder %s190, 31
      %s194 = scalar_select %p193, %s190, 31
      %s195 = smul.addr %s192, 32
      %s196 = sadd.s32 %s194, %s195
      %s197 = smul.addr %s196, 8
      %s198 = scalar_lea.vmem %s0, %s197
      %s199 = smul.u32 32, %s19
      %s200 = smul.u32 32, %s19
      %p201 = scmp.lt.s32.totalorder %s18, 1
      %s202 = scalar_select %p201, %s18, 1
      %p203 = scmp.lt.s32.totalorder %s200, 31
      %s204 = scalar_select %p203, %s200, 31
      %s205 = smul.addr %s202, 32
      %s206 = sadd.s32 %s204, %s205
      %s207 = smul.addr %s206, 8
      %s208 = scalar_lea.vmem %s3, %s207
      %s209 = smul.u32 32, %s19
      %v210 = vld [vmem:[%s198] sm:$0xff]
      %v211 = vld [vmem:[%s198 + $0x8] sm:$0xff]
      %v212 = vld [vmem:[%s198 + $0x10] sm:$0xff]
      %v213 = vld [vmem:[%s198 + $0x18] sm:$0xff]
      %v214 = vld [vmem:[%s198 + $0x20] sm:$0xff]
      %v215 = vld [vmem:[%s198 + $0x28] sm:$0xff]
      %v216 = vld [vmem:[%s198 + $0x30] sm:$0xff]
      %v217 = vld [vmem:[%s198 + $0x38] sm:$0xff]
      %v218 = vld [vmem:[%s198 + $0x40] sm:$0xff]
      %v219 = vld [vmem:[%s198 + $0x48] sm:$0xff]
      %v220 = vld [vmem:[%s198 + $0x50] sm:$0xff]
      %v221 = vld [vmem:[%s198 + $0x58] sm:$0xff]
      %v222 = vld [vmem:[%s198 + $0x60] sm:$0xff]
      %v223 = vld [vmem:[%s198 + $0x68] sm:$0xff]
      %v224 = vld [vmem:[%s198 + $0x70] sm:$0xff]
      %v225 = vld [vmem:[%s198 + $0x78] sm:$0xff]
      %v226 = vld [vmem:[%s198 + $0x80] sm:$0xff]
      %v227 = vld [vmem:[%s198 + $0x88] sm:$0xff]
      %v228 = vld [vmem:[%s198 + $0x90] sm:$0xff]
      %v229 = vld [vmem:[%s198 + $0x98] sm:$0xff]
      %v230 = vld [vmem:[%s198 + $0xa0] sm:$0xff]
      %v231 = vld [vmem:[%s198 + $0xa8] sm:$0xff]
      %v232 = vld [vmem:[%s198 + $0xb0] sm:$0xff]
      %v233 = vld [vmem:[%s198 + $0xb8] sm:$0xff]
      %v234 = vld [vmem:[%s198 + $0xc0] sm:$0xff]
      %v235 = vld [vmem:[%s198 + $0xc8] sm:$0xff]
      %v236 = vld [vmem:[%s198 + $0xd0] sm:$0xff]
      %v237 = vld [vmem:[%s198 + $0xd8] sm:$0xff]
      %v238 = vld [vmem:[%s198 + $0xe0] sm:$0xff]
      %v239 = vld [vmem:[%s198 + $0xe8] sm:$0xff]
      %v240 = vld [vmem:[%s198 + $0xf0] sm:$0xff]
      %v241 = vld [vmem:[%s198 + $0xf8] sm:$0xff]
      %v242 = vld [vmem:[%s1] sm:$0xff]
      %v243 = vld [vmem:[%s1 + $0x8] sm:$0xff]
      %v244 = vld [vmem:[%s1 + $0x10] sm:$0xff]
      %v245 = vld [vmem:[%s1 + $0x18] sm:$0x7]
      %v246 = vld [vmem:[%s2] sm:$0x1]
      %v248 = vlaneseq
      %v249 = vshrl.u32 %v248, 7
      %v250 = vsub.s32 0, %v249
      %v251 = vrot.slane %v246, %v250
      %vm253 = vcmask 220160
      %v255 = vsel %vm253, %v210, 0
      %v258 = vsel %vm253, %v211, 0
      %v261 = vsel %vm253, %v212, 0
      %v264 = vsel %vm253, %v213, 0
      %v267 = vsel %vm253, %v214, 0
      %v270 = vsel %vm253, %v215, 0
      %v273 = vsel %vm253, %v216, 0
      %v276 = vsel %vm253, %v217, 0
      %v279 = vsel %vm253, %v218, 0
      %v282 = vsel %vm253, %v219, 0
      %v285 = vsel %vm253, %v220, 0
      %v288 = vsel %vm253, %v221, 0
      %v291 = vsel %vm253, %v222, 0
      %v294 = vsel %vm253, %v223, 0
      %v297 = vsel %vm253, %v224, 0
      %v300 = vsel %vm253, %v225, 0
      %v303 = vsel %vm253, %v226, 0
      %v306 = vsel %vm253, %v227, 0
      %v309 = vsel %vm253, %v228, 0
      %v312 = vsel %vm253, %v229, 0
      %v315 = vsel %vm253, %v230, 0
      %v318 = vsel %vm253, %v231, 0
      %v321 = vsel %vm253, %v232, 0
      %v324 = vsel %vm253, %v233, 0
      %v327 = vsel %vm253, %v234, 0
      %v330 = vsel %vm253, %v235, 0
      %v333 = vsel %vm253, %v236, 0
      %v336 = vsel %vm253, %v237, 0
      %v339 = vsel %vm253, %v238, 0
      %v342 = vsel %vm253, %v239, 0
      %v345 = vsel %vm253, %v240, 0
      %v348 = vsel %vm253, %v241, 0
      %vm350 = vcmask 1042432
      %v352 = vsel %vm350, %v245, 0
      %354 = vmatprep.subr.mxu0 0.0
      %355 = vmatpush1.msra.mxu0 %v242
      %356 = vmatprep.subr.mxu0 0.0
      %357 = vmatpush1.msra.mxu0 %v243
      %358 = vmatprep.subr.mxu0 0.0
      %359 = vmatpush1.msra.mxu0 %v244
      %360 = vmatprep.subr.mxu0 0.0
      %361 = vmatpush1.msra.mxu0 %v352
      %362 = vmatprep.subr.mxu0 0.0
      %363 = vmatpush1.msra.mxu0 0.0
      %364 = vmatprep.subr.mxu0 0.0
      %365 = vmatpush1.msra.mxu0 0.0
      %366 = vmatprep.subr.mxu0 0.0
      %367 = vmatpush1.msra.mxu0 0.0
      %368 = vmatprep.subr.mxu0 0.0
      %369 = vmatpush1.msra.mxu0 0.0
      %370 = vmatprep.subr.mxu0 0.0
      %371 = vmatpush1.msra.mxu0 0.0
      %372 = vmatprep.subr.mxu0 0.0
      %373 = vmatpush1.msra.mxu0 0.0
      %374 = vmatprep.subr.mxu0 0.0
      %375 = vmatpush1.msra.mxu0 0.0
      %376 = vmatprep.subr.mxu0 0.0
      %377 = vmatpush1.msra.mxu0 0.0
      %378 = vmatprep.subr.mxu0 0.0
      %379 = vmatpush1.msra.mxu0 0.0
      %380 = vmatprep.subr.mxu0 0.0
      %381 = vmatpush1.msra.mxu0 0.0
      %382 = vmatprep.subr.mxu0 0.0
      %383 = vmatpush1.msra.mxu0 0.0
      %384 = vmatprep.subr.mxu0 0.0
      %385 = vmatpush1.msra.mxu0 0.0
      %386 = vmatprep.subr.mxu0 0.0
      %387 = vmatpush1.msra.mxu0 0.0
      %388 = vmatprep.subr.mxu0 0.0
      %389 = vmatpush1.msra.mxu0 0.0
      %390 = vmatprep.subr.mxu0 0.0
      %391 = vmatpush1.msra.mxu0 0.0
      %392 = vmatprep.subr.mxu0 0.0
      %393 = vmatpush1.msra.mxu0 0.0
      %394 = vmatprep.subr.mxu0 0.0
      %395 = vmatpush1.msra.mxu0 0.0
      %396 = vmatprep.subr.mxu0 0.0
      %397 = vmatpush1.msra.mxu0 0.0
      %398 = vmatprep.subr.mxu0 0.0
      %399 = vmatpush1.msra.mxu0 0.0
      %400 = vmatprep.subr.mxu0 0.0
      %401 = vmatpush1.msra.mxu0 0.0
      %402 = vmatprep.subr.mxu0 0.0
      %403 = vmatpush1.msra.mxu0 0.0
      %404 = vmatprep.subr.mxu0 0.0
      %405 = vmatpush1.msra.mxu0 0.0
      %406 = vmatprep.subr.mxu0 0.0
      %407 = vmatpush1.msra.mxu0 0.0
      %408 = vmatprep.subr.mxu0 0.0
      %409 = vmatpush1.msra.mxu0 0.0
      %410 = vmatprep.subr.mxu0 0.0
      %411 = vmatpush1.msra.mxu0 0.0
      %412 = vmatprep.subr.mxu0 0.0
      %413 = vmatpush1.msra.mxu0 0.0
      %414 = vmatprep.subr.mxu0 0.0
      %415 = vmatpush1.msra.mxu0 0.0
      %416 = vmatprep.subr.mxu0 0.0
      %417 = vmatpush1.msra.mxu0 0.0
      %418 = vmatprep.mubr.f32.mxu0 0.0
      %419 = vmatmul.mubr.f32.gmra.mrb[0].mxu0 %v255
      %v420 = vpop.f32.mrb[0].mxu0
      %v421 = vadd.f32 %v251, %v420
      %v422 = vpop.f32.mrb[0].mxu0
      %423 = vmatprep.mubr.f32.mxu0 0.0
      %424 = vmatmul.mubr.f32.gmra.mrb[0].mxu0 %v258
      %v425 = vpop.f32.mrb[0].mxu0
      %v426 = vadd.f32 %v251, %v425
      %v427 = vpop.f32.mrb[0].mxu0
      %428 = vmatprep.mubr.f32.mxu0 0.0
      %429 = vmatmul.mubr.f32.gmra.mrb[0].mxu0 %v261
      %v430 = vpop.f32.mrb[0].mxu0
      %v431 = vadd.f32 %v251, %v430
      %v432 = vpop.f32.mrb[0].mxu0
      %433 = vmatprep.mubr.f32.mxu0 0.0
      %434 = vmatmul.mubr.f32.gmra.mrb[0].mxu0 %v264
      %v435 = vpop.f32.mrb[0].mxu0
      %v436 = vadd.f32 %v251, %v435
      %v437 = vpop.f32.mrb[0].mxu0
      %438 = vmatprep.mubr.f32.mxu0 0.0
      %439 = vmatmul.mubr.f32.gmra.mrb[0].mxu0 %v267
      %v440 = vpop.f32.mrb[0].mxu0
      %v441 = vadd.f32 %v251, %v440
      %v442 = vpop.f32.mrb[0].mxu0
      %443 = vmatprep.mubr.f32.mxu0 0.0
      %444 = vmatmul.mubr.f32.gmra.mrb[0].mxu0 %v270
      %v445 = vpop.f32.mrb[0].mxu0
      %v446 = vadd.f32 %v251, %v445
      %v447 = vpop.f32.mrb[0].mxu0
      %448 = vmatprep.mubr.f32.mxu0 0.0
      %449 = vmatmul.mubr.f32.gmra.mrb[0].mxu0 %v273
      %v450 = vpop.f32.mrb[0].mxu0
      %v451 = vadd.f32 %v251, %v450
      %v452 = vpop.f32.mrb[0].mxu0
      %453 = vmatprep.mubr.f32.mxu0 0.0
      %454 = vmatmul.mubr.f32.gmra.mrb[0].mxu0 %v276
      %v455 = vpop.f32.mrb[0].mxu0
      %v456 = vadd.f32 %v251, %v455
      %v457 = vpop.f32.mrb[0].mxu0
      %458 = vmatprep.mubr.f32.mxu0 0.0
      %459 = vmatmul.mubr.f32.gmra.mrb[0].mxu0 %v279
      %v460 = vpop.f32.mrb[0].mxu0
      %v461 = vadd.f32 %v251, %v460
      %v462 = vpop.f32.mrb[0].mxu0
      %463 = vmatprep.mubr.f32.mxu0 0.0
      %464 = vmatmul.mubr.f32.gmra.mrb[0].mxu0 %v282
      %v465 = vpop.f32.mrb[0].mxu0
      %v466 = vadd.f32 %v251, %v465
      %v467 = vpop.f32.mrb[0].mxu0
      %468 = vmatprep.mubr.f32.mxu0 0.0
      %469 = vmatmul.mubr.f32.gmra.mrb[0].mxu0 %v285
      %v470 = vpop.f32.mrb[0].mxu0
      %v471 = vadd.f32 %v251, %v470
      %v472 = vpop.f32.mrb[0].mxu0
      %473 = vmatprep.mubr.f32.mxu0 0.0
      %474 = vmatmul.mubr.f32.gmra.mrb[0].mxu0 %v288
      %v475 = vpop.f32.mrb[0].mxu0
      %v476 = vadd.f32 %v251, %v475
      %v477 = vpop.f32.mrb[0].mxu0
      %478 = vmatprep.mubr.f32.mxu0 0.0
      %479 = vmatmul.mubr.f32.gmra.mrb[0].mxu0 %v291
      %v480 = vpop.f32.mrb[0].mxu0
      %v481 = vadd.f32 %v251, %v480
      %v482 = vpop.f32.mrb[0].mxu0
      %483 = vmatprep.mubr.f32.mxu0 0.0
      %484 = vmatmul.mubr.f32.gmra.mrb[0].mxu0 %v294
      %v485 = vpop.f32.mrb[0].mxu0
      %v486 = vadd.f32 %v251, %v485
      %v487 = vpop.f32.mrb[0].mxu0
      %488 = vmatprep.mubr.f32.mxu0 0.0
      %489 = vmatmul.mubr.f32.gmra.mrb[0].mxu0 %v297
      %v490 = vpop.f32.mrb[0].mxu0
      %v491 = vadd.f32 %v251, %v490
      %v492 = vpop.f32.mrb[0].mxu0
      %493 = vmatprep.mubr.f32.mxu0 0.0
      %494 = vmatmul.mubr.f32.gmra.mrb[0].mxu0 %v300
      %v495 = vpop.f32.mrb[0].mxu0
      %v496 = vadd.f32 %v251, %v495
      %v497 = vpop.f32.mrb[0].mxu0
      %498 = vmatprep.mubr.f32.mxu0 0.0
      %499 = vmatmul.mubr.f32.gmra.mrb[0].mxu0 %v303
      %v500 = vpop.f32.mrb[0].mxu0
      %v501 = vadd.f32 %v251, %v500
      %v502 = vpop.f32.mrb[0].mxu0
      %503 = vmatprep.mubr.f32.mxu0 0.0
      %504 = vmatmul.mubr.f32.gmra.mrb[0].mxu0 %v306
      %v505 = vpop.f32.mrb[0].mxu0
      %v506 = vadd.f32 %v251, %v505
      %v507 = vpop.f32.mrb[0].mxu0
      %508 = vmatprep.mubr.f32.mxu0 0.0
      %509 = vmatmul.mubr.f32.gmra.mrb[0].mxu0 %v309
      %v510 = vpop.f32.mrb[0].mxu0
      %v511 = vadd.f32 %v251, %v510
      %v512 = vpop.f32.mrb[0].mxu0
      %513 = vmatprep.mubr.f32.mxu0 0.0
      %514 = vmatmul.mubr.f32.gmra.mrb[0].mxu0 %v312
      %v515 = vpop.f32.mrb[0].mxu0
      %v516 = vadd.f32 %v251, %v515
      %v517 = vpop.f32.mrb[0].mxu0
      %518 = vmatprep.mubr.f32.mxu0 0.0
      %519 = vmatmul.mubr.f32.gmra.mrb[0].mxu0 %v315
      %v520 = vpop.f32.mrb[0].mxu0
      %v521 = vadd.f32 %v251, %v520
      %v522 = vpop.f32.mrb[0].mxu0
      %523 = vmatprep.mubr.f32.mxu0 0.0
      %524 = vmatmul.mubr.f32.gmra.mrb[0].mxu0 %v318
      %v525 = vpop.f32.mrb[0].mxu0
      %v526 = vadd.f32 %v251, %v525
      %v527 = vpop.f32.mrb[0].mxu0
      %528 = vmatprep.mubr.f32.mxu0 0.0
      %529 = vmatmul.mubr.f32.gmra.mrb[0].mxu0 %v321
      %v530 = vpop.f32.mrb[0].mxu0
      %v531 = vadd.f32 %v251, %v530
      %v532 = vpop.f32.mrb[0].mxu0
      %533 = vmatprep.mubr.f32.mxu0 0.0
      %534 = vmatmul.mubr.f32.gmra.mrb[0].mxu0 %v324
      %v535 = vpop.f32.mrb[0].mxu0
      %v536 = vadd.f32 %v251, %v535
      %v537 = vpop.f32.mrb[0].mxu0
      %538 = vmatprep.mubr.f32.mxu0 0.0
      %539 = vmatmul.mubr.f32.gmra.mrb[0].mxu0 %v327
      %v540 = vpop.f32.mrb[0].mxu0
      %v541 = vadd.f32 %v251, %v540
      %v542 = vpop.f32.mrb[0].mxu0
      %543 = vmatprep.mubr.f32.mxu0 0.0
      %544 = vmatmul.mubr.f32.gmra.mrb[0].mxu0 %v330
      %v545 = vpop.f32.mrb[0].mxu0
      %v546 = vadd.f32 %v251, %v545
      %v547 = vpop.f32.mrb[0].mxu0
      %548 = vmatprep.mubr.f32.mxu0 0.0
      %549 = vmatmul.mubr.f32.gmra.mrb[0].mxu0 %v333
      %v550 = vpop.f32.mrb[0].mxu0
      %v551 = vadd.f32 %v251, %v550
      %v552 = vpop.f32.mrb[0].mxu0
      %553 = vmatprep.mubr.f32.mxu0 0.0
      %554 = vmatmul.mubr.f32.gmra.mrb[0].mxu0 %v336
      %v555 = vpop.f32.mrb[0].mxu0
      %v556 = vadd.f32 %v251, %v555
      %v557 = vpop.f32.mrb[0].mxu0
      %558 = vmatprep.mubr.f32.mxu0 0.0
      %559 = vmatmul.mubr.f32.gmra.mrb[0].mxu0 %v339
      %v560 = vpop.f32.mrb[0].mxu0
      %v561 = vadd.f32 %v251, %v560
      %v562 = vpop.f32.mrb[0].mxu0
      %563 = vmatprep.mubr.f32.mxu0 0.0
      %564 = vmatmul.mubr.f32.gmra.mrb[0].mxu0 %v342
      %v565 = vpop.f32.mrb[0].mxu0
      %v566 = vadd.f32 %v251, %v565
      %v567 = vpop.f32.mrb[0].mxu0
      %568 = vmatprep.mubr.f32.mxu0 0.0
      %569 = vmatmul.mubr.f32.gmra.mrb[0].mxu0 %v345
      %v570 = vpop.f32.mrb[0].mxu0
      %v571 = vadd.f32 %v251, %v570
      %v572 = vpop.f32.mrb[0].mxu0
      %573 = vmatprep.mubr.f32.mxu0 0.0
      %574 = vmatmul.mubr.f32.gmra.mrb[0].mxu0 %v348
      %v575 = vpop.f32.mrb[0].mxu0
      %v576 = vadd.f32 %v251, %v575
      %v577 = vpop.f32.mrb[0].mxu0
      %578 = vdwg.mxu0
      %v579 = vmax.f32 %v421, 0.0
      %v580 = vmax.f32 %v426, 0.0
      %v581 = vmax.f32 %v431, 0.0
      %v582 = vmax.f32 %v436, 0.0
      %v583 = vmax.f32 %v441, 0.0
      %v584 = vmax.f32 %v446, 0.0
      %v585 = vmax.f32 %v451, 0.0
      %v586 = vmax.f32 %v456, 0.0
      %v587 = vmax.f32 %v461, 0.0
      %v588 = vmax.f32 %v466, 0.0
      %v589 = vmax.f32 %v471, 0.0
      %v590 = vmax.f32 %v476, 0.0
      %v591 = vmax.f32 %v481, 0.0
      %v592 = vmax.f32 %v486, 0.0
      %v593 = vmax.f32 %v491, 0.0
      %v594 = vmax.f32 %v496, 0.0
      %v595 = vmax.f32 %v501, 0.0
      %v596 = vmax.f32 %v506, 0.0
      %v597 = vmax.f32 %v511, 0.0
      %v598 = vmax.f32 %v516, 0.0
      %v599 = vmax.f32 %v521, 0.0
      %v600 = vmax.f32 %v526, 0.0
      %v601 = vmax.f32 %v531, 0.0
      %v602 = vmax.f32 %v536, 0.0
      %v603 = vmax.f32 %v541, 0.0
      %v604 = vmax.f32 %v546, 0.0
      %v605 = vmax.f32 %v551, 0.0
      %v606 = vmax.f32 %v556, 0.0
      %v607 = vmax.f32 %v561, 0.0
      %v608 = vmax.f32 %v566, 0.0
      %v609 = vmax.f32 %v571, 0.0
      %v610 = vmax.f32 %v576, 0.0
      %vm611 = vcmask 523264
      %612 = vst.msk [vmem:[%s208] sm:$0xff] %vm611, %v579
      %613 = vst.msk [vmem:[%s208 + $0x8] sm:$0xff] %vm611, %v580
      %614 = vst.msk [vmem:[%s208 + $0x10] sm:$0xff] %vm611, %v581
      %615 = vst.msk [vmem:[%s208 + $0x18] sm:$0xff] %vm611, %v582
      %616 = vst.msk [vmem:[%s208 + $0x20] sm:$0xff] %vm611, %v583
      %617 = vst.msk [vmem:[%s208 + $0x28] sm:$0xff] %vm611, %v584
      %618 = vst.msk [vmem:[%s208 + $0x30] sm:$0xff] %vm611, %v585
      %619 = vst.msk [vmem:[%s208 + $0x38] sm:$0xff] %vm611, %v586
      %620 = vst.msk [vmem:[%s208 + $0x40] sm:$0xff] %vm611, %v587
      %621 = vst.msk [vmem:[%s208 + $0x48] sm:$0xff] %vm611, %v588
      %622 = vst.msk [vmem:[%s208 + $0x50] sm:$0xff] %vm611, %v589
      %623 = vst.msk [vmem:[%s208 + $0x58] sm:$0xff] %vm611, %v590
      %624 = vst.msk [vmem:[%s208 + $0x60] sm:$0xff] %vm611, %v591
      %625 = vst.msk [vmem:[%s208 + $0x68] sm:$0xff] %vm611, %v592
      %626 = vst.msk [vmem:[%s208 + $0x70] sm:$0xff] %vm611, %v593
      %627 = vst.msk [vmem:[%s208 + $0x78] sm:$0xff] %vm611, %v594
      %628 = vst.msk [vmem:[%s208 + $0x80] sm:$0xff] %vm611, %v595
      %629 = vst.msk [vmem:[%s208 + $0x88] sm:$0xff] %vm611, %v596
      %630 = vst.msk [vmem:[%s208 + $0x90] sm:$0xff] %vm611, %v597
      %631 = vst.msk [vmem:[%s208 + $0x98] sm:$0xff] %vm611, %v598
      %632 = vst.msk [vmem:[%s208 + $0xa0] sm:$0xff] %vm611, %v599
      %633 = vst.msk [vmem:[%s208 + $0xa8] sm:$0xff] %vm611, %v600
      %634 = vst.msk [vmem:[%s208 + $0xb0] sm:$0xff] %vm611, %v601
      %635 = vst.msk [vmem:[%s208 + $0xb8] sm:$0xff] %vm611, %v602
      %636 = vst.msk [vmem:[%s208 + $0xc0] sm:$0xff] %vm611, %v603
      %637 = vst.msk [vmem:[%s208 + $0xc8] sm:$0xff] %vm611, %v604
      %638 = vst.msk [vmem:[%s208 + $0xd0] sm:$0xff] %vm611, %v605
      %639 = vst.msk [vmem:[%s208 + $0xd8] sm:$0xff] %vm611, %v606
      %640 = vst.msk [vmem:[%s208 + $0xe0] sm:$0xff] %vm611, %v607
      %641 = vst.msk [vmem:[%s208 + $0xe8] sm:$0xff] %vm611, %v608
      %642 = vst.msk [vmem:[%s208 + $0xf0] sm:$0xff] %vm611, %v609
      %643 = vst.msk [vmem:[%s208 + $0xf8] sm:$0xff] %vm611, %v610
      %s644 = smul.u32 32, %s19
      %p645 = scmp.lt.s32.totalorder %s18, 1
      %s646 = scalar_select %p645, %s18, 1
      %p647 = scmp.lt.s32.totalorder %s644, 31
      %s648 = scalar_select %p647, %s644, 31
      %s649 = smul.addr %s646, 32
      %s650 = sadd.s32 %s648, %s649
      %s651 = smul.addr %s650, 8
      %s652 = scalar_lea.vmem %s3, %s651
      // Predicated region
      $region33: #{tpu_custom_call.1} parent=31 // pred_check
        %p653 = pneg %p116
      $region34: #{tpu_custom_call.1} parent=31 // pred_check_branch
        %655 = sbr.rel (%p653) target = $region36
      $region35: #{tpu_custom_call.1} parent=31 // pred_region
        %s656 = smul.u32 32, %s19
      $region36: #{tpu_custom_call.1} parent=31 // pred_fallthru
        _
    $region32: #{tpu_custom_call.1} parent=5 // pred_fallthru
      _
    %p657 = scmp.le.s32.totalorder 2, %s9
    // Predicated region
    $region37: #{tpu_custom_call.1} parent=5 // pred_check
      %p658 = pneg %p657
    $region38: #{tpu_custom_call.1} parent=5 // pred_check_branch
      %660 = sbr.rel (%p658) target = $region40
    $region39: #{tpu_custom_call.1} parent=5 // pred_region
      %s661 = ssub.s32 %s9, 2
      // Predicated region
      $region41: #{tpu_custom_call.1} parent=39 // pred_check
        %p662 = pneg %p122
      $region42: #{tpu_custom_call.1} parent=39 // pred_check_branch
        %664 = sbr.rel (%p662) target = $region44
      $region43: #{tpu_custom_call.1} parent=39 // pred_region
        %s665 = smul.u32 32, %s21
        %p666 = scmp.lt.s32.totalorder %s20, 1
        %s667 = scalar_select %p666, %s20, 1
        %p668 = scmp.lt.s32.totalorder %s665, 31
        %s669 = scalar_select %p668, %s665, 31
        %s670 = smul.addr %s667, 32
        %s671 = sadd.s32 %s669, %s670
        %s672 = smul.addr %s671, 8
        %s673 = scalar_lea.vmem %s3, %s672
      $region44: #{tpu_custom_call.1} parent=39 // pred_fallthru
        _
    $region40: #{tpu_custom_call.1} parent=5 // pred_fallthru
      _
  $region6: #{tpu_custom_call.1} parent=0 // loop_footer
    %s13 = sadd.s32 1, %s9
  $region7: #{tpu_custom_call.1} parent=0 // loop_footer_branch
    %8 = sbr.rel target = $region3
  $region8: #{tpu_custom_call.1} parent=0 // loop_exit
    _

</llo_original>
